<compile_context>
chip_gen: v7x
topology: tpu7x:2x2x1
jax: 0.10.0
libtpu: 0.0.40
codegen_flags: <defaults>
</compile_context>

<pallas_src>
import numpy as np
import jax
import jax.numpy as jnp
from jax.experimental import pallas as pl
from jax.experimental.pallas import tpu as pltpu


# ----------------------------------------------------------------------------------
# Fused Pallas kernel: whole forward pass as 4 small matmuls + ReLUs.
# ----------------------------------------------------------------------------------
def _cnn_stacking_kernel(x_ref, t1_ref, t2_ref, hw1_ref, b1_ref, hw2_ref, b2_ref,
                         out_ref):
    """x_ref  : (TB, C0*L0)   NCW row-major flattened input tile (compute dtype)
       t1_ref : (C0*L0, L1*C1) block-Toeplitz conv1 weights   (compute dtype)
       t2_ref : (L1*C1, L2*C2) block-Toeplitz conv2 weights   (compute dtype)
       hw1_ref: (L2*C2, H)     head Linear1 weights, rows pre-permuted for the
                               channels-last flatten produced by t2 (compute dtype)
       b1_ref : (1, H) f32, hw2_ref: (H, O) compute dtype, b2_ref: (1, O) f32
       out_ref: (TB, O) f32
    All dots accumulate in f32; bias-add and ReLU stay in f32.
    """
    wdt = t1_ref.dtype
    x = x_ref[...]
    h1 = jnp.maximum(
        jnp.dot(x, t1_ref[...], preferred_element_type=jnp.float32), 0.0)        # conv1+ReLU
    h2 = jnp.maximum(
        jnp.dot(h1.astype(wdt), t2_ref[...],
                preferred_element_type=jnp.float32), 0.0)                         # conv2+ReLU
    z1 = jnp.dot(h2.astype(wdt), hw1_ref[...],
                 preferred_element_type=jnp.float32) + b1_ref[...]
    a1 = jnp.maximum(z1, 0.0)                                                     # Linear+ReLU
    out_ref[...] = (
        jnp.dot(a1.astype(wdt), hw2_ref[...],
                preferred_element_type=jnp.float32) + b2_ref[...])


def _round_up(x, m):
    return ((x + m - 1) // m) * m


def _pick_batch_tile(B, batch_tile):
    """Tile the batch so that (a) tb is a multiple of 8 (except tiny full-batch
    blocks), (b) large batches use big tiles (default 1024) to amortize per-step
    overhead, and (c) mid-size batches still produce >= 2 parallel grid steps so
    both TensorCores on v7x are used."""
    if B <= 8:
        return B                                   # single full-dims block
    batch_tile = max(8, _round_up(batch_tile, 8))
    return min(batch_tile, _round_up(pl.cdiv(B, 2), 8))


def cnn_stacking_forward(x_flat, t1, t2, hw1, b1, hw2, b2, *, batch_tile=1024):
    B, f_in = x_flat.shape
    n_out = hw2.shape[-1]
    tb = _pick_batch_tile(B, batch_tile)
    grid = (pl.cdiv(B, tb),)

    act_map = lambda i: (i, 0)
    const_map = lambda i: (0, 0)    # weights stay resident in VMEM across steps

    return pl.pallas_call(
        _cnn_stacking_kernel,
        out_shape=jax.ShapeDtypeStruct((B, n_out), jnp.float32),
        grid_spec=pltpu.PrefetchScalarGridSpec(
            num_scalar_prefetch=0,
            grid=grid,
            in_specs=[
                pl.BlockSpec((tb, f_in), act_map),
                pl.BlockSpec(t1.shape, const_map),
                pl.BlockSpec(t2.shape, const_map),
                pl.BlockSpec(hw1.shape, const_map),
                pl.BlockSpec(b1.shape, const_map),
                pl.BlockSpec(hw2.shape, const_map),
                pl.BlockSpec(b2.shape, const_map),
            ],
            out_specs=pl.BlockSpec((tb, n_out), act_map),
        ),
        compiler_params=pltpu.CompilerParams(
            dimension_semantics=("parallel",)),
    )(x_flat, t1, t2, hw1, b1, hw2, b2)


# ----------------------------------------------------------------------------------
# Init-time weight transforms (done once, outside the hot path).
# ----------------------------------------------------------------------------------
def _conv1d_toeplitz(w_pt, length_in, in_channel_major):
    """Fold a valid Conv1d (stride 1, no pad, no bias) into a dense matrix T so that
       h_flat = x_flat @ T.

    w_pt: (C_out, C_in, K) PyTorch conv weight.
    x_flat index convention: c*L_in + l if `in_channel_major` (NCW flatten),
                             else l*C_in + c (channels-last flatten).
    h_flat index convention: l*C_out + o (channels-last flatten) -> feeds the next
    Toeplitz conv / the permuted head weight directly.
    """
    w = np.asarray(w_pt)
    c_out, c_in, k_sz = w.shape
    length_out = length_in - (k_sz - 1)
    t = np.zeros((length_in * c_in, length_out * c_out), np.float32)
    for l in range(length_out):
        for k in range(k_sz):
            for c in range(c_in):
                if in_channel_major:
                    row = c * length_in + (l + k)
                else:
                    row = (l + k) * c_in + c
                t[row, l * c_out:(l + 1) * c_out] = w[:, c, k]
    return jnp.asarray(t)


class CNNStacking1dPallas:
    """CNNStacking1d(n_models, n_channels_list, use_bias=False,
                     kwargs_head={'n_features_list': [_, H, O], 'use_tail_as_out': True,
                                  'block_name': 'LBAD', 'activ': 'relu',
                                  'use_bn': False, 'drop_rate': 0.0})
    Eval-mode forward: conv1d(no bias)+ReLU x2, channel-major flatten, Linear+ReLU, Linear.
    """

    def __init__(self, n_models, n_channels_list, head_hidden, n_out, key,
                 compute_dtype=jnp.bfloat16, batch_tile=1024):
        self.n_conv_layers = len(n_channels_list) - 1
        assert self.n_conv_layers == 2, "this synthetic instance uses 2 conv layers"
        self.compute_dtype = compute_dtype
        self.batch_tile = batch_tile
        k1, k2, k3, k4, k5, k6 = jax.random.split(key, 6)

        c0, c1, c2 = n_channels_list
        l0 = n_models
        l1 = l0 - 2
        l2 = l1 - 2

        # PyTorch layouts (kept for the pure-JAX reference).
        self.conv_w1_pt = 0.1 * jax.random.normal(k1, (c1, c0, 3), jnp.float32)
        self.conv_w2_pt = 0.1 * jax.random.normal(k2, (c2, c1, 3), jnp.float32)

        # Block-Toeplitz conv matrices.  Conv1 reads the raw NCW flatten of x;
        # conv2 reads conv1's channels-last flatten.
        t1_f32 = _conv1d_toeplitz(self.conv_w1_pt, l0, in_channel_major=True)
        t2_f32 = _conv1d_toeplitz(self.conv_w2_pt, l1, in_channel_major=False)

        f_in = l2 * c2  # == (n_models - 2*n_conv_layers) * n_channels_list[-1]
        lw1_pt = 0.1 * jax.random.normal(k3, (head_hidden, f_in), jnp.float32)
        lb1_pt = 0.1 * jax.random.normal(k4, (head_hidden,), jnp.float32)
        lw2_pt = 0.1 * jax.random.normal(k5, (n_out, head_hidden), jnp.float32)
        lb2_pt = 0.1 * jax.random.normal(k6, (n_out,), jnp.float32)
        self.lw1_pt, self.lb1_pt = lw1_pt, lb1_pt
        self.lw2_pt, self.lb2_pt = lw2_pt, lb2_pt

        # Fold PyTorch's channel-major flatten (c2*L2 + l2) into a one-time row
        # permutation of head_w1 so the kernel can use the channels-last flatten
        # (l2*C2 + c2) that the Toeplitz conv2 already produces.
        hw1 = lw1_pt.T                                   # (F, H), rows indexed c2*L2+l2
        hw1_perm = (hw1.reshape(c2, l2, head_hidden)
                       .transpose(1, 0, 2)
                       .reshape(l2 * c2, head_hidden))   # rows indexed l2*C2+c2

        # Kernel-side weights: matmul operands in the compute dtype (bf16 by default,
        # f32 accumulation inside the kernel), biases kept in f32.
        self.t1 = t1_f32.astype(compute_dtype)
        self.t2 = t2_f32.astype(compute_dtype)
        self.head_w1 = hw1_perm.astype(compute_dtype)
        self.head_b1 = lb1_pt.reshape(1, -1).astype(jnp.float32)
        self.head_w2 = lw2_pt.T.astype(compute_dtype)
        self.head_b2 = lb2_pt.reshape(1, -1).astype(jnp.float32)

    def __call__(self, x_ncw):
        # x_ncw: (B, C0, n_models) -- PyTorch NCW convention.
        bs = x_ncw.shape[0]
        x_flat = x_ncw.reshape(bs, -1).astype(self.compute_dtype)  # free row-major flatten
        return cnn_stacking_forward(
            x_flat, self.t1, self.t2,
            self.head_w1, self.head_b1, self.head_w2, self.head_b2,
            batch_tile=self.batch_tile)


# ----------------------------------------------------------------------------------
def reference_forward(x_ncw, model):
    """Pure-JAX f32 reference replicating the PyTorch forward (eval mode)."""
    h = x_ncw
    for w in (model.conv_w1_pt, model.conv_w2_pt):
        h = jax.lax.conv_general_dilated(
            h, w, window_strides=(1,), padding="VALID",
            dimension_numbers=("NCW", "OIW", "NCW"))
        h = jnp.maximum(h, 0.0)
    h = h.reshape(h.shape[0], -1)                       # channel-major flatten
    h = jnp.maximum(h @ model.lw1_pt.T + model.lb1_pt, 0.0)
    return h @ model.lw2_pt.T + model.lb2_pt


# ----------------------------------------------------------------------------------
if __name__ == "__main__":
    key = jax.random.PRNGKey(0)
    k_x, k_x2, k_w = jax.random.split(key, 3)

    # Small, module-consistent shapes:
    #   n_models = 10 base-model predictions, n_channels_list = [5, 8, 16]
    #   -> head input = (10 - 2*2) * 16 = 96; head = [96, 32, 5]
    B, n_models = 2, 10
    n_channels_list = [5, 8, 16]
    head_hidden, n_out = 32, 5

    model = CNNStacking1dPallas(n_models, n_channels_list, head_hidden, n_out, k_w)

    # bf16 matmul operands (f32 accumulation) -> loosened tolerance vs f32 reference.
    RTOL, ATOL = 2e-2, 2e-2

    # Case 1: tiny batch (single full-dims block).
    x = jax.random.normal(k_x, (B, n_channels_list[0], n_models), jnp.float32)
    out = jax.block_until_ready(model(x))
    ref = jax.block_until_ready(reference_forward(x, model))
    assert out.shape == (B, n_out)
    assert jnp.allclose(out, ref, rtol=RTOL, atol=ATOL), (out, ref)

    # Case 2: mid-size batch -> 2 parallel grid steps (v7x both-TC path) with a
    # partial last block (padded rows flow garbage but are discarded: benign).
    B2 = 40
    x2 = jax.random.normal(k_x2, (B2, n_channels_list[0], n_models), jnp.float32)
    out2 = jax.block_until_ready(model(x2))
    ref2 = jax.block_until_ready(reference_forward(x2, model))
    assert out2.shape == (B2, n_out)
    assert jnp.allclose(out2, ref2, rtol=RTOL, atol=ATOL), (out2, ref2)

    print("KERNEL_OK")
</pallas_src>

<mosaic_0001>
module attributes {stable_mosaic.version = 11 : i64} {
  func.func @_cnn_stacking_kernel(%arg0: i32, %arg1: memref<2x50xbf16, #tpu.memory_space<vmem>>, %arg2: memref<50x64xbf16, #tpu.memory_space<vmem>>, %arg3: memref<64x96xbf16, #tpu.memory_space<vmem>>, %arg4: memref<96x32xbf16, #tpu.memory_space<vmem>>, %arg5: memref<1x32xf32, #tpu.memory_space<vmem>>, %arg6: memref<32x5xbf16, #tpu.memory_space<vmem>>, %arg7: memref<1x5xf32, #tpu.memory_space<vmem>>, %arg8: memref<2x5xf32, #tpu.memory_space<vmem>>) attributes {dimension_semantics = [#tpu.dimension_semantics<parallel>], iteration_bounds = array<i64: 1>, scalar_prefetch = 0 : i64, scratch_operands = 0 : i64, tpu.core_type = #tpu.core_type<tc>, window_params = [{transform_indices = @transform_0, window_bounds = array<i64: 2, 50>}, {pipeline_mode = #tpu.pipeline_mode<synchronous>, transform_indices = @transform_1, window_bounds = array<i64: 50, 64>}, {pipeline_mode = #tpu.pipeline_mode<synchronous>, transform_indices = @transform_2, window_bounds = array<i64: 64, 96>}, {pipeline_mode = #tpu.pipeline_mode<synchronous>, transform_indices = @transform_3, window_bounds = array<i64: 96, 32>}, {pipeline_mode = #tpu.pipeline_mode<synchronous>, transform_indices = @transform_4, window_bounds = array<i64: 1, 32>}, {pipeline_mode = #tpu.pipeline_mode<synchronous>, transform_indices = @transform_5, window_bounds = array<i64: 32, 5>}, {pipeline_mode = #tpu.pipeline_mode<synchronous>, transform_indices = @transform_6, window_bounds = array<i64: 1, 5>}, {transform_indices = @transform_7, window_bounds = array<i64: 2, 5>}]} {
    %c0 = arith.constant 0 : index
    %c0_0 = arith.constant 0 : index
    %0 = vector.load %arg1[%c0, %c0_0] : memref<2x50xbf16, #tpu.memory_space<vmem>>, vector<2x50xbf16>
    %c0_1 = arith.constant 0 : index
    %c0_2 = arith.constant 0 : index
    %1 = vector.load %arg2[%c0_1, %c0_2] : memref<50x64xbf16, #tpu.memory_space<vmem>>, vector<50x64xbf16>
    %cst = arith.constant dense<0.000000e+00> : vector<2x64xf32>
    %2 = tpu.matmul %0, %1, %cst {dimension_numbers = #tpu.dot_dimension_numbers<[1], [0], [0], [1], [0, 0, 1, 1], [], []>} : vector<2x50xbf16>, vector<50x64xbf16>, vector<2x64xf32> -> vector<2x64xf32>
    %cst_3 = arith.constant 0.000000e+00 : f32
    %3 = vector.broadcast %cst_3 : f32 to vector<2x64xf32>
    %4 = arith.maximumf %2, %3 : vector<2x64xf32>
    %5 = arith.truncf %4 : vector<2x64xf32> to vector<2x64xbf16>
    %c0_4 = arith.constant 0 : index
    %c0_5 = arith.constant 0 : index
    %6 = vector.load %arg3[%c0_4, %c0_5] : memref<64x96xbf16, #tpu.memory_space<vmem>>, vector<64x96xbf16>
    %cst_6 = arith.constant dense<0.000000e+00> : vector<2x96xf32>
    %7 = tpu.matmul %5, %6, %cst_6 {dimension_numbers = #tpu.dot_dimension_numbers<[1], [0], [0], [1], [0, 0, 1, 1], [], []>} : vector<2x64xbf16>, vector<64x96xbf16>, vector<2x96xf32> -> vector<2x96xf32>
    %cst_7 = arith.constant 0.000000e+00 : f32
    %8 = vector.broadcast %cst_7 : f32 to vector<2x96xf32>
    %9 = arith.maximumf %7, %8 : vector<2x96xf32>
    %10 = arith.truncf %9 : vector<2x96xf32> to vector<2x96xbf16>
    %c0_8 = arith.constant 0 : index
    %c0_9 = arith.constant 0 : index
    %11 = vector.load %arg4[%c0_8, %c0_9] : memref<96x32xbf16, #tpu.memory_space<vmem>>, vector<96x32xbf16>
    %cst_10 = arith.constant dense<0.000000e+00> : vector<2x32xf32>
    %12 = tpu.matmul %10, %11, %cst_10 {dimension_numbers = #tpu.dot_dimension_numbers<[1], [0], [0], [1], [0, 0, 1, 1], [], []>} : vector<2x96xbf16>, vector<96x32xbf16>, vector<2x32xf32> -> vector<2x32xf32>
    %c0_11 = arith.constant 0 : index
    %c0_12 = arith.constant 0 : index
    %13 = vector.load %arg5[%c0_11, %c0_12] : memref<1x32xf32, #tpu.memory_space<vmem>>, vector<1x32xf32>
    %14 = vector.broadcast %13 : vector<1x32xf32> to vector<2x32xf32>
    %15 = arith.addf %12, %14 : vector<2x32xf32>
    %cst_13 = arith.constant 0.000000e+00 : f32
    %16 = vector.broadcast %cst_13 : f32 to vector<2x32xf32>
    %17 = arith.maximumf %15, %16 : vector<2x32xf32>
    %18 = arith.truncf %17 : vector<2x32xf32> to vector<2x32xbf16>
    %c0_14 = arith.constant 0 : index
    %c0_15 = arith.constant 0 : index
    %19 = vector.load %arg6[%c0_14, %c0_15] : memref<32x5xbf16, #tpu.memory_space<vmem>>, vector<32x5xbf16>
    %cst_16 = arith.constant dense<0.000000e+00> : vector<2x5xf32>
    %20 = tpu.matmul %18, %19, %cst_16 {dimension_numbers = #tpu.dot_dimension_numbers<[1], [0], [0], [1], [0, 0, 1, 1], [], []>} : vector<2x32xbf16>, vector<32x5xbf16>, vector<2x5xf32> -> vector<2x5xf32>
    %c0_17 = arith.constant 0 : index
    %c0_18 = arith.constant 0 : index
    %21 = vector.load %arg7[%c0_17, %c0_18] : memref<1x5xf32, #tpu.memory_space<vmem>>, vector<1x5xf32>
    %22 = vector.broadcast %21 : vector<1x5xf32> to vector<2x5xf32>
    %23 = arith.addf %20, %22 : vector<2x5xf32>
    %c0_19 = arith.constant 0 : index
    %c0_20 = arith.constant 0 : index
    %24 = vector.load %arg8[%c0_19, %c0_20] : memref<2x5xf32, #tpu.memory_space<vmem>>, vector<2x5xf32>
    tpu.vector_store %arg8[%c0_19, %c0_20], %23 {strides = array<i32>} : memref<2x5xf32, #tpu.memory_space<vmem>>, vector<2x5xf32>,
    return
  }
  func.func @transform_0(%arg0: i32) -> (i32, i32) {
    %c0_i32 = arith.constant 0 : i32
    %c0_i32_0 = arith.constant 0 : i32
    return %arg0, %c0_i32 : i32, i32
  }
  func.func @transform_1(%arg0: i32) -> (i32, i32) {
    %c0_i32 = arith.constant 0 : i32
    %c0_i32_0 = arith.constant 0 : i32
    %c0_i32_1 = arith.constant 0 : i32
    return %c0_i32, %c0_i32_0 : i32, i32
  }
  func.func @transform_2(%arg0: i32) -> (i32, i32) {
    %c0_i32 = arith.constant 0 : i32
    %c0_i32_0 = arith.constant 0 : i32
    %c0_i32_1 = arith.constant 0 : i32
    return %c0_i32, %c0_i32_0 : i32, i32
  }
  func.func @transform_3(%arg0: i32) -> (i32, i32) {
    %c0_i32 = arith.constant 0 : i32
    %c0_i32_0 = arith.constant 0 : i32
    %c0_i32_1 = arith.constant 0 : i32
    return %c0_i32, %c0_i32_0 : i32, i32
  }
  func.func @transform_4(%arg0: i32) -> (i32, i32) {
    %c0_i32 = arith.constant 0 : i32
    %c0_i32_0 = arith.constant 0 : i32
    %c0_i32_1 = arith.constant 0 : i32
    return %c0_i32, %c0_i32_0 : i32, i32
  }
  func.func @transform_5(%arg0: i32) -> (i32, i32) {
    %c0_i32 = arith.constant 0 : i32
    %c0_i32_0 = arith.constant 0 : i32
    %c0_i32_1 = arith.constant 0 : i32
    return %c0_i32, %c0_i32_0 : i32, i32
  }
  func.func @transform_6(%arg0: i32) -> (i32, i32) {
    %c0_i32 = arith.constant 0 : i32
    %c0_i32_0 = arith.constant 0 : i32
    %c0_i32_1 = arith.constant 0 : i32
    return %c0_i32, %c0_i32_0 : i32, i32
  }
  func.func @transform_7(%arg0: i32) -> (i32, i32) {
    %c0_i32 = arith.constant 0 : i32
    %c0_i32_0 = arith.constant 0 : i32
    return %arg0, %c0_i32 : i32, i32
  }
}

</mosaic_0001>

<llo_original>
// kernel: tpu_custom_call.1
$region0: #{tpu_custom_call.1}
  #allocation0 [shape = 'u32[]', space=smem, size = 0x4, offset = 0x4, fixed_abs, tag = 'smem constant byte address 0x4 - core index']
  #allocation1 [shape = 'u32[144,128]{1,0:T(1,128)}', space=vmem, size = 0x12000, scoped, tag = 'internal scratch']
  %s0 = inlined_call_operand.vmem [shape: bf16[2,50], index: 0, kind: input, shape index: {}]
  %s1 = inlined_call_operand.vmem [shape: bf16[50,64], index: 1, kind: input, shape index: {}]
  %s2 = inlined_call_operand.vmem [shape: bf16[64,96], index: 2, kind: input, shape index: {}]
  %s3 = inlined_call_operand.vmem [shape: bf16[96,32], index: 3, kind: input, shape index: {}]
  %s4 = inlined_call_operand.vmem [shape: f32[1,32], index: 4, kind: input, shape index: {}]
  %s5 = inlined_call_operand.vmem [shape: bf16[32,5], index: 5, kind: input, shape index: {}]
  %s6 = inlined_call_operand.vmem [shape: f32[1,5], index: 6, kind: input, shape index: {}]
  %s7 = inlined_call_operand.hbm [shape: f32[2,5], index: 7, kind: output, shape index: {}]
  %s8 = sld [smem:[#allocation0]]
  $region38: #{tpu_custom_call.1} parent=0
    _
  %s10 = ssub.s32 1, %s8
  %s11 = scalar_select 0, %s10, %s8
  $region1: #{tpu_custom_call.1} parent=0
    #allocation2 [shape = 'u8[1024]{0}', space=vmem, size = 0x400, scoped, tag = 'output window, operand 0, single buffered']
    #allocation3 [shape = 's32[1]{0}', space=sflag, size = 0x4, scoped, tag = 'scoped memory for tpu_custom_call.1']
    %12 = vsyncpa [#allocation3], 0
    // Predicated region
    $region2: #{tpu_custom_call.1} parent=1 // pred_check
      _
    $region3: #{tpu_custom_call.1} parent=1 // pred_check_branch
      %14 = sbr.rel (0) target = $region5
    $region4: #{tpu_custom_call.1} parent=1 // pred_region
      _
    $region5: #{tpu_custom_call.1} parent=1 // pred_fallthru
      _
    // Predicated region
    $region6: #{tpu_custom_call.1} parent=1 // pred_check
      _
    $region7: #{tpu_custom_call.1} parent=1 // pred_check_branch
      %16 = sbr.rel (0) target = $region9
    $region8: #{tpu_custom_call.1} parent=1 // pred_region
      _
    $region9: #{tpu_custom_call.1} parent=1 // pred_fallthru
      _
    // Predicated region
    $region10: #{tpu_custom_call.1} parent=1 // pred_check
      _
    $region11: #{tpu_custom_call.1} parent=1 // pred_check_branch
      %18 = sbr.rel (0) target = $region13
    $region12: #{tpu_custom_call.1} parent=1 // pred_region
      _
    $region13: #{tpu_custom_call.1} parent=1 // pred_fallthru
      _
    // Predicated region
    $region14: #{tpu_custom_call.1} parent=1 // pred_check
      _
    $region15: #{tpu_custom_call.1} parent=1 // pred_check_branch
      %20 = sbr.rel (0) target = $region17
    $region16: #{tpu_custom_call.1} parent=1 // pred_region
      _
    $region17: #{tpu_custom_call.1} parent=1 // pred_fallthru
      _
    // Predicated region
    $region18: #{tpu_custom_call.1} parent=1 // pred_check
      _
    $region19: #{tpu_custom_call.1} parent=1 // pred_check_branch
      %22 = sbr.rel (0) target = $region21
    $region20: #{tpu_custom_call.1} parent=1 // pred_region
      _
    $region21: #{tpu_custom_call.1} parent=1 // pred_fallthru
      _
    // Predicated region
    $region22: #{tpu_custom_call.1} parent=1 // pred_check
      _
    $region23: #{tpu_custom_call.1} parent=1 // pred_check_branch
      %24 = sbr.rel (0) target = $region25
    $region24: #{tpu_custom_call.1} parent=1 // pred_region
      _
    $region25: #{tpu_custom_call.1} parent=1 // pred_fallthru
      _
    // Predicated region
    $region26: #{tpu_custom_call.1} parent=1 // pred_check
      _
    $region27: #{tpu_custom_call.1} parent=1 // pred_check_branch
      %26 = sbr.rel (0) target = $region29
    $region28: #{tpu_custom_call.1} parent=1 // pred_region
      _
    $region29: #{tpu_custom_call.1} parent=1 // pred_fallthru
      _
    %v28 = vld [vmem:[%s0] sm:$0x1]
    %v29 = vld [vmem:[%s1] sm:$0xf]
    %v30 = vld [vmem:[%s1 + $0x4] sm:$0xf]
    %v31 = vld [vmem:[%s1 + $0x8] sm:$0xf]
    %v32 = vld [vmem:[%s1 + $0xc] sm:$0xf]
    %v33 = vld [vmem:[%s1 + $0x10] sm:$0xf]
    %v34 = vld [vmem:[%s1 + $0x14] sm:$0xf]
    %v35 = vld [vmem:[%s1 + $0x18] sm:$0x1]
    %v43 = vunpack.c.l.b16 %v29
    %v44 = vunpack.c.l.b16 %v30
    %v45 = vunpack.c.l.b16 %v31
    %v46 = vunpack.c.l.b16 %v32
    %v47 = vunpack.c.l.b16 %v33
    %v48 = vunpack.c.l.b16 %v34
    %v49 = vunpack.c.l.b16 %v35
    %v50 = vpack.c.b16 %v44, %v43
    %v51 = vpack.c.b16 %v46, %v45
    %v52 = vpack.c.b16 %v48, %v47
    %v53 = vpack.c.b16 %v49, %v49
    %vm57 = vcmask 408576
    %v59 = vsel %vm57, %v28, 0
    %vm61 = vcmask 1040384
    %v63 = vsel %vm61, %v53, 0
    %65 = vmatprep.subr.bf16.mxu0 0
    %66 = vmatpush1.bf16.msra.mxu0 %v50
    %67 = vmatprep.subr.bf16.mxu0 0
    %68 = vmatpush1.bf16.msra.mxu0 %v51
    %69 = vmatprep.subr.bf16.mxu0 0
    %70 = vmatpush1.bf16.msra.mxu0 %v52
    %71 = vmatprep.subr.bf16.mxu0 0
    %72 = vmatpush1.bf16.msra.mxu0 %v63
    %73 = vmatprep.subr.bf16.mxu0 0
    %74 = vmatpush1.bf16.msra.mxu0 0
    %75 = vmatprep.subr.bf16.mxu0 0
    %76 = vmatpush1.bf16.msra.mxu0 0
    %77 = vmatprep.subr.bf16.mxu0 0
    %78 = vmatpush1.bf16.msra.mxu0 0
    %79 = vmatprep.subr.bf16.mxu0 0
    %80 = vmatpush1.bf16.msra.mxu0 0
    %81 = vmatprep.subr.bf16.mxu0 0
    %82 = vmatpush1.bf16.msra.mxu0 0
    %83 = vmatprep.subr.bf16.mxu0 0
    %84 = vmatpush1.bf16.msra.mxu0 0
    %85 = vmatprep.subr.bf16.mxu0 0
    %86 = vmatpush1.bf16.msra.mxu0 0
    %87 = vmatprep.subr.bf16.mxu0 0
    %88 = vmatpush1.bf16.msra.mxu0 0
    %89 = vmatprep.subr.bf16.mxu0 0
    %90 = vmatpush1.bf16.msra.mxu0 0
    %91 = vmatprep.subr.bf16.mxu0 0
    %92 = vmatpush1.bf16.msra.mxu0 0
    %93 = vmatprep.subr.bf16.mxu0 0
    %94 = vmatpush1.bf16.msra.mxu0 0
    %95 = vmatprep.subr.bf16.mxu0 0
    %96 = vmatpush1.bf16.msra.mxu0 0
    %97 = vmatprep.mubr.bf16.mxu0 0
    %98 = vmatmul.mubr.bf16.gmra.mrb[0].mxu0 %v59
    %v99 = vpop.f32.mrb[0].mxu0
    %v100 = vadd.f32 0.0, %v99
    %v101 = vpop.f32.mrb[0].mxu0
    %v102 = vpop.f32.mrb[0].mxu0
    %v103 = vpop.f32.mrb[0].mxu0
    %104 = vdwg.mxu0
    %v105 = vmax.f32 %v100, 0.0
    %v106 = vpack.c.bf16 %v105, %v105
    %v107 = vld [vmem:[%s2] sm:$0xf]
    %v108 = vld [vmem:[%s2 + $0x4] sm:$0xf]
    %v109 = vld [vmem:[%s2 + $0x8] sm:$0xf]
    %v110 = vld [vmem:[%s2 + $0xc] sm:$0xf]
    %v111 = vld [vmem:[%s2 + $0x10] sm:$0xf]
    %v112 = vld [vmem:[%s2 + $0x14] sm:$0xf]
    %v113 = vld [vmem:[%s2 + $0x18] sm:$0xf]
    %v114 = vld [vmem:[%s2 + $0x1c] sm:$0xf]
    %v123 = vunpack.c.l.b16 %v107
    %v124 = vunpack.c.l.b16 %v108
    %v125 = vunpack.c.l.b16 %v109
    %v126 = vunpack.c.l.b16 %v110
    %v127 = vunpack.c.l.b16 %v111
    %v128 = vunpack.c.l.b16 %v112
    %v129 = vunpack.c.l.b16 %v113
    %v130 = vunpack.c.l.b16 %v114
    %v131 = vpack.c.b16 %v124, %v123
    %v132 = vpack.c.b16 %v126, %v125
    %v133 = vpack.c.b16 %v128, %v127
    %v134 = vpack.c.b16 %v130, %v129
    %vm139 = vcmask 523264
    %v141 = vsel %vm139, %v106, 0
    %143 = vmatprep.subr.bf16.mxu0 0
    %144 = vmatpush1.bf16.msra.mxu0 %v131
    %145 = vmatprep.subr.bf16.mxu0 0
    %146 = vmatpush1.bf16.msra.mxu0 %v132
    %147 = vmatprep.subr.bf16.mxu0 0
    %148 = vmatpush1.bf16.msra.mxu0 %v133
    %149 = vmatprep.subr.bf16.mxu0 0
    %150 = vmatpush1.bf16.msra.mxu0 %v134
    %151 = vmatprep.subr.bf16.mxu0 0
    %152 = vmatpush1.bf16.msra.mxu0 0
    %153 = vmatprep.subr.bf16.mxu0 0
    %154 = vmatpush1.bf16.msra.mxu0 0
    %155 = vmatprep.subr.bf16.mxu0 0
    %156 = vmatpush1.bf16.msra.mxu0 0
    %157 = vmatprep.subr.bf16.mxu0 0
    %158 = vmatpush1.bf16.msra.mxu0 0
    %159 = vmatprep.subr.bf16.mxu0 0
    %160 = vmatpush1.bf16.msra.mxu0 0
    %161 = vmatprep.subr.bf16.mxu0 0
    %162 = vmatpush1.bf16.msra.mxu0 0
    %163 = vmatprep.subr.bf16.mxu0 0
    %164 = vmatpush1.bf16.msra.mxu0 0
    %165 = vmatprep.subr.bf16.mxu0 0
    %166 = vmatpush1.bf16.msra.mxu0 0
    %167 = vmatprep.subr.bf16.mxu0 0
    %168 = vmatpush1.bf16.msra.mxu0 0
    %169 = vmatprep.subr.bf16.mxu0 0
    %170 = vmatpush1.bf16.msra.mxu0 0
    %171 = vmatprep.subr.bf16.mxu0 0
    %172 = vmatpush1.bf16.msra.mxu0 0
    %173 = vmatprep.subr.bf16.mxu0 0
    %174 = vmatpush1.bf16.msra.mxu0 0
    %175 = vmatprep.mubr.bf16.mxu0 0
    %176 = vmatmul.mubr.bf16.gmra.mrb[0].mxu0 %v141
    %v177 = vpop.f32.mrb[0].mxu0
    %v178 = vadd.f32 0.0, %v177
    %v179 = vpop.f32.mrb[0].mxu0
    %v180 = vpop.f32.mrb[0].mxu0
    %v181 = vpop.f32.mrb[0].mxu0
    %182 = vdwg.mxu0
    %v183 = vmax.f32 %v178, 0.0
    %v184 = vpack.c.bf16 %v183, %v183
    %v185 = vld [vmem:[%s3] sm:$0xf]
    %v186 = vld [vmem:[%s3 + $0x4] sm:$0xf]
    %v187 = vld [vmem:[%s3 + $0x8] sm:$0xf]
    %v188 = vld [vmem:[%s3 + $0xc] sm:$0xf]
    %v189 = vld [vmem:[%s3 + $0x10] sm:$0xf]
    %v190 = vld [vmem:[%s3 + $0x14] sm:$0xf]
    %v191 = vld [vmem:[%s3 + $0x18] sm:$0xf]
    %v192 = vld [vmem:[%s3 + $0x1c] sm:$0xf]
    %v193 = vld [vmem:[%s3 + $0x20] sm:$0xf]
    %v194 = vld [vmem:[%s3 + $0x24] sm:$0xf]
    %v195 = vld [vmem:[%s3 + $0x28] sm:$0xf]
    %v196 = vld [vmem:[%s3 + $0x2c] sm:$0xf]
    %v197 = vld [vmem:[%s4] sm:$0x1]
    %v199 = vlaneseq
    %v200 = vshrl.u32 %v199, 7
    %v201 = vsub.s32 0, %v200
    %v202 = vrot.slane %v197, %v201
    %v216 = vunpack.c.l.b16 %v185
    %v217 = vunpack.c.l.b16 %v186
    %v218 = vunpack.c.l.b16 %v187
    %v219 = vunpack.c.l.b16 %v188
    %v220 = vunpack.c.l.b16 %v189
    %v221 = vunpack.c.l.b16 %v190
    %v222 = vunpack.c.l.b16 %v191
    %v223 = vunpack.c.l.b16 %v192
    %v224 = vunpack.c.l.b16 %v193
    %v225 = vunpack.c.l.b16 %v194
    %v226 = vunpack.c.l.b16 %v195
    %v227 = vunpack.c.l.b16 %v196
    %v228 = vpack.c.b16 %v217, %v216
    %v229 = vpack.c.b16 %v219, %v218
    %v230 = vpack.c.b16 %v221, %v220
    %v231 = vpack.c.b16 %v223, %v222
    %v232 = vpack.c.b16 %v225, %v224
    %v233 = vpack.c.b16 %v227, %v226
    %vm240 = vcmask 785408
    %v242 = vsel %vm240, %v184, 0
    %244 = vmatprep.subr.bf16.mxu0 0
    %245 = vmatpush1.bf16.msra.mxu0 %v228
    %246 = vmatprep.subr.bf16.mxu0 0
    %247 = vmatpush1.bf16.msra.mxu0 %v229
    %248 = vmatprep.subr.bf16.mxu0 0
    %249 = vmatpush1.bf16.msra.mxu0 %v230
    %250 = vmatprep.subr.bf16.mxu0 0
    %251 = vmatpush1.bf16.msra.mxu0 %v231
    %252 = vmatprep.subr.bf16.mxu0 0
    %253 = vmatpush1.bf16.msra.mxu0 %v232
    %254 = vmatprep.subr.bf16.mxu0 0
    %255 = vmatpush1.bf16.msra.mxu0 %v233
    %256 = vmatprep.subr.bf16.mxu0 0
    %257 = vmatpush1.bf16.msra.mxu0 0
    %258 = vmatprep.subr.bf16.mxu0 0
    %259 = vmatpush1.bf16.msra.mxu0 0
    %260 = vmatprep.subr.bf16.mxu0 0
    %261 = vmatpush1.bf16.msra.mxu0 0
    %262 = vmatprep.subr.bf16.mxu0 0
    %263 = vmatpush1.bf16.msra.mxu0 0
    %264 = vmatprep.subr.bf16.mxu0 0
    %265 = vmatpush1.bf16.msra.mxu0 0
    %266 = vmatprep.subr.bf16.mxu0 0
    %267 = vmatpush1.bf16.msra.mxu0 0
    %268 = vmatprep.subr.bf16.mxu0 0
    %269 = vmatpush1.bf16.msra.mxu0 0
    %270 = vmatprep.subr.bf16.mxu0 0
    %271 = vmatpush1.bf16.msra.mxu0 0
    %272 = vmatprep.subr.bf16.mxu0 0
    %273 = vmatpush1.bf16.msra.mxu0 0
    %274 = vmatprep.subr.bf16.mxu0 0
    %275 = vmatpush1.bf16.msra.mxu0 0
    %276 = vmatprep.mubr.bf16.mxu0 0
    %277 = vmatmul.mubr.bf16.gmra.mrb[0].mxu0 %v242
    %v278 = vpop.f32.mrb[0].mxu0
    %v279 = vadd.f32 %v202, %v278
    %v280 = vpop.f32.mrb[0].mxu0
    %v281 = vpop.f32.mrb[0].mxu0
    %v282 = vpop.f32.mrb[0].mxu0
    %283 = vdwg.mxu0
    %v284 = vmax.f32 %v279, 0.0
    %v285 = vpack.c.bf16 %v284, %v284
    %v286 = vld [vmem:[%s5] sm:$0xf]
    %v287 = vld [vmem:[%s5 + $0x4] sm:$0xf]
    %v288 = vld [vmem:[%s5 + $0x8] sm:$0xf]
    %v289 = vld [vmem:[%s5 + $0xc] sm:$0xf]
    %v290 = vld [vmem:[%s6] sm:$0x1]
    %v292 = vlaneseq
    %v293 = vshrl.u32 %v292, 7
    %v294 = vsub.s32 0, %v293
    %v295 = vrot.slane %v290, %v294
    %v301 = vunpack.c.l.b16 %v286
    %v302 = vunpack.c.l.b16 %v287
    %v303 = vunpack.c.l.b16 %v288
    %v304 = vunpack.c.l.b16 %v289
    %v305 = vpack.c.b16 %v302, %v301
    %v306 = vpack.c.b16 %v304, %v303
    %vm309 = vcmask 261120
    %v311 = vsel %vm309, %v285, 0
    %313 = vmatprep.subr.bf16.mxu0 0
    %314 = vmatpush1.bf16.msra.mxu0 %v305
    %315 = vmatprep.subr.bf16.mxu0 0
    %316 = vmatpush1.bf16.msra.mxu0 %v306
    %317 = vmatprep.subr.bf16.mxu0 0
    %318 = vmatpush1.bf16.msra.mxu0 0
    %319 = vmatprep.subr.bf16.mxu0 0
    %320 = vmatpush1.bf16.msra.mxu0 0
    %321 = vmatprep.subr.bf16.mxu0 0
    %322 = vmatpush1.bf16.msra.mxu0 0
    %323 = vmatprep.subr.bf16.mxu0 0
    %324 = vmatpush1.bf16.msra.mxu0 0
    %325 = vmatprep.subr.bf16.mxu0 0
    %326 = vmatpush1.bf16.msra.mxu0 0
    %327 = vmatprep.subr.bf16.mxu0 0
    %328 = vmatpush1.bf16.msra.mxu0 0
    %329 = vmatprep.subr.bf16.mxu0 0
    %330 = vmatpush1.bf16.msra.mxu0 0
    %331 = vmatprep.subr.bf16.mxu0 0
    %332 = vmatpush1.bf16.msra.mxu0 0
    %333 = vmatprep.subr.bf16.mxu0 0
    %334 = vmatpush1.bf16.msra.mxu0 0
    %335 = vmatprep.subr.bf16.mxu0 0
    %336 = vmatpush1.bf16.msra.mxu0 0
    %337 = vmatprep.subr.bf16.mxu0 0
    %338 = vmatpush1.bf16.msra.mxu0 0
    %339 = vmatprep.subr.bf16.mxu0 0
    %340 = vmatpush1.bf16.msra.mxu0 0
    %341 = vmatprep.subr.bf16.mxu0 0
    %342 = vmatpush1.bf16.msra.mxu0 0
    %343 = vmatprep.subr.bf16.mxu0 0
    %344 = vmatpush1.bf16.msra.mxu0 0
    %345 = vmatprep.mubr.bf16.mxu0 0
    %346 = vmatmul.mubr.bf16.gmra.mrb[0].mxu0 %v311
    %v347 = vpop.f32.mrb[0].mxu0
    %v348 = vadd.f32 %v295, %v347
    %v349 = vpop.f32.mrb[0].mxu0
    %v350 = vpop.f32.mrb[0].mxu0
    %v351 = vpop.f32.mrb[0].mxu0
    %352 = vdwg.mxu0
    %vm353 = vcmask 33792
    %354 = vst.msk [vmem:[#allocation2] sm:$0x3] %vm353, %v348
    // Predicated region
    $region30: #{tpu_custom_call.1} parent=1 // pred_check
      _
    $region31: #{tpu_custom_call.1} parent=1 // pred_check_branch
      %356 = sbr.rel (0) target = $region33
    $region32: #{tpu_custom_call.1} parent=1 // pred_region
      %s358 = ssub.s32 32, 32
      %359 = vsyncadd [#allocation3], %s358
      %s361 = sshll.u32 [#allocation2], 4
      %s362 = int_to_ptr.vmem [resolvable:$true] %s361
      %364 = dma.vmem_to_hbm [thread:$0]  %s362, 32, %s7, [#allocation3]
    $region33: #{tpu_custom_call.1} parent=1 // pred_fallthru
      _
    // Predicated region
    $region34: #{tpu_custom_call.1} parent=1 // pred_check
      _
    $region35: #{tpu_custom_call.1} parent=1 // pred_check_branch
      %366 = sbr.rel (0) target = $region37
    $region36: #{tpu_custom_call.1} parent=1 // pred_region
      %367 = dma.done [#allocation3], 32
    $region37: #{tpu_custom_call.1} parent=1 // pred_fallthru
      _
    %368 = vsyncpa [#allocation3], 1

</llo_original>
